<compile_context>
chip_gen: v5e
topology: v5e:2x2
jax: 0.10.0
libtpu: 0.0.40
codegen_flags: <defaults>
</compile_context>

<pallas_src>
import functools

import jax
import jax.numpy as jnp
from jax import lax
from jax.experimental import pallas as pl
from jax.experimental.pallas import tpu as pltpu


def _round_up(x, m):
    return (x + m - 1) // m * m


# ----------------------------------------------------------------------------- #
# Kernel 1: max_unpool2d (2x2, stride 2), interleave-free output layout           #
# ----------------------------------------------------------------------------- #
def _unpool_kernel(x_ref, idx_ref, out_ref):
    # x_ref:   (1, Hp, Wp, C)  pooled values
    # idx_ref: (1, Hp, Wp, C)  int32 flat indices into the (2Hp, 2Wp) plane
    # out_ref: (1, Hp, 2, Wp, 2*C) -- axis 2 is py, the last dim is (px, c)
    #
    # NOTE: only indices inside each element's own 2x2 window are honored
    # (always true for kernel=stride=2 max_pool2d indices, which is how
    # MaxUnpool2d is used in SegNet-style decoders).
    _, Hp, Wp, C = x_ref.shape
    Wo = 2 * Wp
    x = x_ref[...]
    idx = idx_ref[...]
    h = lax.broadcasted_iota(jnp.int32, idx.shape, 1)
    w = lax.broadcasted_iota(jnp.int32, idx.shape, 2)
    # Hoisted base index: position of idx inside its own 2x2 window = py*Wo + px.
    rel = idx - (2 * h * Wo + 2 * w)
    zero = jnp.zeros_like(x)
    for py in range(2):
        row = jnp.concatenate(
            [jnp.where(rel == (py * Wo + px), x, zero) for px in range(2)],
            axis=-1)                                   # (1, Hp, Wp, 2*C)
        out_ref[:, :, py, :, :] = row.astype(out_ref.dtype)


def max_unpool2x2(x_nhwc, idx_nhwc, out_hw, out_dtype=None):
    N, Hp, Wp, C = x_nhwc.shape
    Ho, Wo = out_hw
    assert Ho == 2 * Hp and Wo == 2 * Wp
    if out_dtype is None:
        out_dtype = x_nhwc.dtype
    out = pl.pallas_call(
        _unpool_kernel,
        out_shape=jax.ShapeDtypeStruct((N, Hp, 2, Wp, 2 * C), out_dtype),
        grid=(N,),
        in_specs=[
            pl.BlockSpec((1, Hp, Wp, C), lambda n: (n, 0, 0, 0)),
            pl.BlockSpec((1, Hp, Wp, C), lambda n: (n, 0, 0, 0)),
        ],
        out_specs=pl.BlockSpec((1, Hp, 2, Wp, 2 * C), lambda n: (n, 0, 0, 0, 0)),
        compiler_params=pltpu.CompilerParams(dimension_semantics=("parallel",)),
    )(x_nhwc, idx_nhwc)
    # (N, Hp, 2, Wp, 2C) -> (N, 2Hp, 2Wp, C) is a contiguous (free) reshape.
    return out.reshape(N, Ho, Wo, C)


# ----------------------------------------------------------------------------- #
# Kernel 2: Conv3x3 (in-kernel im2col, 9 shifted MXU dots) + folded BN + ReLU     #
# ----------------------------------------------------------------------------- #
def _conv_kernel(x_ref, w_ref, b_ref, o_ref, acc_ref, *, tile_h, w_out, cin):
    # x_ref:   (1, H+2, W+2, Cin)   whole padded image (resident across row tiles)
    # w_ref:   (9, Cin, Cout_p)     folded (BN-scaled) weights, k = dy*3 + dx
    # b_ref:   (1, Cout_p)          folded bias (f32)
    # o_ref:   (1, tile_h, W, Cout_p)
    # acc_ref: (tile_h*W, Cout_p)   f32 VMEM accumulator
    i = pl.program_id(1)
    row0 = pl.multiple_of(i * tile_h, tile_h)
    acc_ref[...] = jnp.zeros_like(acc_ref)
    for dy in range(3):
        xs = x_ref[0, pl.ds(row0 + dy, tile_h), :, :]          # (tile_h, W+2, Cin)
        for dx in range(3):
            patch = xs[:, dx:dx + w_out, :].reshape(tile_h * w_out, cin)
            acc_ref[...] += jnp.dot(patch, w_ref[dy * 3 + dx],
                                    preferred_element_type=jnp.float32)
    y = jnp.maximum(acc_ref[...] + b_ref[...], 0.0)
    o_ref[...] = y.reshape(1, tile_h, w_out, o_ref.shape[-1]).astype(o_ref.dtype)


def _pick_tile_h(H, W, target_rows):
    best = 1
    limit = max(target_rows, W)
    for t in range(1, H + 1):
        if H % t == 0 and t * W <= limit:
            best = t
    return best


def conv3x3_bn_relu(x_nhwc, w_oihw, b_conv, gamma, beta, mean, var, eps=1e-5,
                    compute_dtype=jnp.bfloat16, out_dtype=None, target_rows=512):
    """3x3 same-padding conv + eval-mode BatchNorm + ReLU.

    Input may carry extra zero-padded channels (Cin_x >= weight Cin); output has
    Cout padded up to a multiple of 128 and the padded channels are exactly 0.
    """
    N, H, W, Cin_x = x_nhwc.shape
    Cout, Cin_w = w_oihw.shape[0], w_oihw.shape[1]
    assert Cin_w <= Cin_x
    if out_dtype is None:
        out_dtype = x_nhwc.dtype
    Cout_p = _round_up(Cout, 128)

    # Fold conv bias + eval-mode BN into the weights (scale) and a bias vector.
    s = gamma / jnp.sqrt(var + eps)                              # (Cout,)
    bias = s * (b_conv - mean) + beta                            # (Cout,)
    wm = jnp.transpose(w_oihw, (2, 3, 1, 0)) * s                 # (3,3,Cin_w,Cout)
    wm = wm.reshape(9, Cin_w, Cout)
    wm = jnp.pad(wm, ((0, 0), (0, Cin_x - Cin_w), (0, Cout_p - Cout)))
    wm = wm.astype(compute_dtype)
    bias = jnp.pad(bias, (0, Cout_p - Cout)).reshape(1, Cout_p).astype(jnp.float32)

    # Spatial zero padding (single cheap pass, also casts the streamed operand).
    xp = jnp.pad(x_nhwc, ((0, 0), (1, 1), (1, 1), (0, 0))).astype(compute_dtype)

    tile_h = _pick_tile_h(H, W, target_rows)
    n_h = H // tile_h

    kernel = functools.partial(_conv_kernel, tile_h=tile_h, w_out=W, cin=Cin_x)
    out = pl.pallas_call(
        kernel,
        out_shape=jax.ShapeDtypeStruct((N, H, W, Cout_p), out_dtype),
        grid=(N, n_h),
        in_specs=[
            # Full padded image: block index constant across the row-tile axis,
            # so it is DMA'd only once per batch element.
            pl.BlockSpec((1, H + 2, W + 2, Cin_x), lambda n, i: (n, 0, 0, 0)),
            pl.BlockSpec((9, Cin_x, Cout_p), lambda n, i: (0, 0, 0)),
            pl.BlockSpec((1, Cout_p), lambda n, i: (0, 0)),
        ],
        out_specs=pl.BlockSpec((1, tile_h, W, Cout_p), lambda n, i: (n, i, 0, 0)),
        scratch_shapes=[pltpu.VMEM((tile_h * W, Cout_p), jnp.float32)],
        compiler_params=pltpu.CompilerParams(
            dimension_semantics=("parallel", "parallel")),
    )(xp, wm, bias)
    return out                    # (N, H, W, Cout_p); channels >= Cout are zero


# ----------------------------------------------------------------------------- #
# _Decoder forward                                                                #
# ----------------------------------------------------------------------------- #
def decoder_forward(params, x_nchw, indices_nchw, size,
                    compute_dtype=jnp.bfloat16):
    N, C, Hp, Wp = x_nchw.shape
    Ho, Wo = size[2], size[3]
    assert Ho * Wo < 2 ** 31  # int32 flat indices are sufficient
    x = jnp.transpose(x_nchw, (0, 2, 3, 1))
    idx = jnp.transpose(indices_nchw, (0, 2, 3, 1)).astype(jnp.int32)

    up = max_unpool2x2(x, idx, (Ho, Wo), out_dtype=compute_dtype)
    h1 = conv3x3_bn_relu(up, params["w1"], params["b1"], params["g1"],
                         params["be1"], params["m1"], params["v1"],
                         compute_dtype=compute_dtype, out_dtype=compute_dtype)
    h2 = conv3x3_bn_relu(h1, params["w2"], params["b2"], params["g2"],
                         params["be2"], params["m2"], params["v2"],
                         compute_dtype=compute_dtype, out_dtype=jnp.float32)
    n_out = params["w2"].shape[0]
    return jnp.transpose(h2[..., :n_out], (0, 3, 1, 2))


# ----------------------------------------------------------------------------- #
# Pure-JAX reference (for validation)                                             #
# ----------------------------------------------------------------------------- #
def _ref_decoder(params, x_nchw, idx_nchw, size):
    N, C, Hp, Wp = x_nchw.shape
    Ho, Wo = size[2], size[3]
    up = jnp.zeros((N, C, Ho * Wo), x_nchw.dtype)
    flat_v = x_nchw.reshape(N, C, Hp * Wp)
    flat_i = idx_nchw.reshape(N, C, Hp * Wp)
    up = jax.vmap(jax.vmap(lambda u, i, v: u.at[i].set(v)))(up, flat_i, flat_v)
    up = up.reshape(N, C, Ho, Wo)

    def block(x, w, b, g, be, m, v):
        y = lax.conv_general_dilated(
            x, w, (1, 1), ((1, 1), (1, 1)),
            dimension_numbers=("NCHW", "OIHW", "NCHW"),
            precision=lax.Precision.HIGHEST) + b[None, :, None, None]
        y = g[None, :, None, None] * (y - m[None, :, None, None]) / \
            jnp.sqrt(v[None, :, None, None] + 1e-5) + be[None, :, None, None]
        return jnp.maximum(y, 0.0)

    y = block(up, params["w1"], params["b1"], params["g1"],
              params["be1"], params["m1"], params["v1"])
    y = block(y, params["w2"], params["b2"], params["g2"],
              params["be2"], params["m2"], params["v2"])
    return y


if __name__ == "__main__":
    # TODO(synk): BatchNorm is applied in eval mode (running stats); training-mode
    # batch statistics and Dropout (only present when n_blocks==3) are not implemented.
    n_in, n_out = 4, 8
    N, Hp, Wp = 2, 8, 8
    Ho, Wo = 2 * Hp, 2 * Wp
    size = (N, n_in, Ho, Wo)

    key = jax.random.PRNGKey(0)
    keys = jax.random.split(key, 16)

    params = {
        "w1": 0.1 * jax.random.normal(keys[0], (n_in, n_in, 3, 3), jnp.float32),
        "b1": 0.1 * jax.random.normal(keys[1], (n_in,), jnp.float32),
        "g1": 1.0 + 0.1 * jax.random.normal(keys[2], (n_in,), jnp.float32),
        "be1": 0.1 * jax.random.normal(keys[3], (n_in,), jnp.float32),
        "m1": 0.05 * jax.random.normal(keys[4], (n_in,), jnp.float32),
        "v1": 0.9 + jnp.abs(0.1 * jax.random.normal(keys[5], (n_in,), jnp.float32)),
        "w2": 0.1 * jax.random.normal(keys[6], (n_out, n_in, 3, 3), jnp.float32),
        "b2": 0.1 * jax.random.normal(keys[7], (n_out,), jnp.float32),
        "g2": 1.0 + 0.1 * jax.random.normal(keys[8], (n_out,), jnp.float32),
        "be2": 0.1 * jax.random.normal(keys[9], (n_out,), jnp.float32),
        "m2": 0.05 * jax.random.normal(keys[10], (n_out,), jnp.float32),
        "v2": 0.9 + jnp.abs(0.1 * jax.random.normal(keys[11], (n_out,), jnp.float32)),
    }

    # Pooled features + valid max-pool (2x2, stride 2) indices, PyTorch convention:
    # indices are flat offsets into the (Ho, Wo) plane of the unpooled output.
    x = jax.random.normal(keys[12], (N, n_in, Hp, Wp), jnp.float32)
    py = jax.random.randint(keys[13], (N, n_in, Hp, Wp), 0, 2)
    px = jax.random.randint(keys[14], (N, n_in, Hp, Wp), 0, 2)
    hh = jnp.arange(Hp, dtype=jnp.int32)[None, None, :, None]
    ww = jnp.arange(Wp, dtype=jnp.int32)[None, None, None, :]
    indices = ((2 * hh + py) * Wo + (2 * ww + px)).astype(jnp.int32)

    out = decoder_forward(params, x, indices, size)
    out = jax.block_until_ready(out)

    ref = jax.block_until_ready(_ref_decoder(params, x, indices, size))
    assert out.shape == (N, n_out, Ho, Wo), out.shape
    err = float(jnp.max(jnp.abs(out - ref)))
    assert jnp.allclose(out, ref, atol=5e-2, rtol=5e-2), err

    print("KERNEL_OK")
</pallas_src>

<mosaic_0001>
module attributes {stable_mosaic.version = 11 : i64} {
  func.func @_unpool_kernel(%arg0: i32, %arg1: memref<1x8x8x4xf32, #tpu.memory_space<vmem>>, %arg2: memref<1x8x8x4xi32, #tpu.memory_space<vmem>>, %arg3: memref<1x8x2x8x8xbf16, #tpu.memory_space<vmem>>) attributes {dimension_semantics = [#tpu.dimension_semantics<parallel>], iteration_bounds = array<i64: 2>, scalar_prefetch = 0 : i64, scratch_operands = 0 : i64, tpu.core_type = #tpu.core_type<tc>, window_params = [{transform_indices = @transform_0, window_bounds = array<i64: 1, 8, 8, 4>}, {transform_indices = @transform_1, window_bounds = array<i64: 1, 8, 8, 4>}, {transform_indices = @transform_2, window_bounds = array<i64: 1, 8, 2, 8, 8>}]} {
    %c0 = arith.constant 0 : index
    %c0_0 = arith.constant 0 : index
    %c0_1 = arith.constant 0 : index
    %c0_2 = arith.constant 0 : index
    %0 = vector.load %arg1[%c0, %c0_0, %c0_1, %c0_2] : memref<1x8x8x4xf32, #tpu.memory_space<vmem>>, vector<1x8x8x4xf32>
    %c0_3 = arith.constant 0 : index
    %c0_4 = arith.constant 0 : index
    %c0_5 = arith.constant 0 : index
    %c0_6 = arith.constant 0 : index
    %1 = vector.load %arg2[%c0_3, %c0_4, %c0_5, %c0_6] : memref<1x8x8x4xi32, #tpu.memory_space<vmem>>, vector<1x8x8x4xi32>
    %2 = tpu.iota {dimensions = array<i32: 1>} : vector<1x8x8x4xi32>
    %3 = tpu.iota {dimensions = array<i32: 2>} : vector<1x8x8x4xi32>
    %c2_i32 = arith.constant 2 : i32
    %4 = vector.broadcast %c2_i32 : i32 to vector<1x8x8x4xi32>
    %5 = arith.muli %4, %2 : vector<1x8x8x4xi32>
    %c16_i32 = arith.constant 16 : i32
    %6 = vector.broadcast %c16_i32 : i32 to vector<1x8x8x4xi32>
    %7 = arith.muli %5, %6 : vector<1x8x8x4xi32>
    %c2_i32_7 = arith.constant 2 : i32
    %8 = vector.broadcast %c2_i32_7 : i32 to vector<1x8x8x4xi32>
    %9 = arith.muli %8, %3 : vector<1x8x8x4xi32>
    %10 = arith.addi %7, %9 : vector<1x8x8x4xi32>
    %11 = arith.subi %1, %10 : vector<1x8x8x4xi32>
    %cst = arith.constant 0.000000e+00 : f32
    %12 = vector.broadcast %cst : f32 to vector<1x8x8x4xf32>
    %c0_i32 = arith.constant 0 : i32
    %13 = vector.broadcast %c0_i32 : i32 to vector<1x8x8x4xi32>
    %14 = arith.cmpi eq, %11, %13 : vector<1x8x8x4xi32>
    %15 = arith.select %14, %0, %12 : vector<1x8x8x4xi1>, vector<1x8x8x4xf32>
    %c1_i32 = arith.constant 1 : i32
    %16 = vector.broadcast %c1_i32 : i32 to vector<1x8x8x4xi32>
    %17 = arith.cmpi eq, %11, %16 : vector<1x8x8x4xi32>
    %18 = arith.select %17, %0, %12 : vector<1x8x8x4xi1>, vector<1x8x8x4xf32>
    %19 = tpu.concatenate %15, %18 in 3 : vector<1x8x8x4xf32>, vector<1x8x8x4xf32> -> vector<1x8x8x8xf32>
    %20 = arith.truncf %19 : vector<1x8x8x8xf32> to vector<1x8x8x8xbf16>
    %c0_8 = arith.constant 0 : index
    %c0_9 = arith.constant 0 : index
    %c0_10 = arith.constant 0 : index
    %c0_11 = arith.constant 0 : index
    %c0_12 = arith.constant 0 : index
    %21 = vector.load %arg3[%c0_8, %c0_9, %c0_10, %c0_11, %c0_12] : memref<1x8x2x8x8xbf16, #tpu.memory_space<vmem>>, vector<1x8x1x8x8xbf16>
    %22 = vector.shape_cast %21 : vector<1x8x1x8x8xbf16> to vector<1x8x8x8xbf16>
    %23 = vector.shape_cast %20 : vector<1x8x8x8xbf16> to vector<1x8x1x8x8xbf16>
    tpu.vector_store %arg3[%c0_8, %c0_9, %c0_10, %c0_11, %c0_12], %23 {strides = array<i32>} : memref<1x8x2x8x8xbf16, #tpu.memory_space<vmem>>, vector<1x8x1x8x8xbf16>,
    %c16_i32_13 = arith.constant 16 : i32
    %24 = vector.broadcast %c16_i32_13 : i32 to vector<1x8x8x4xi32>
    %25 = arith.cmpi eq, %11, %24 : vector<1x8x8x4xi32>
    %26 = arith.select %25, %0, %12 : vector<1x8x8x4xi1>, vector<1x8x8x4xf32>
    %c17_i32 = arith.constant 17 : i32
    %27 = vector.broadcast %c17_i32 : i32 to vector<1x8x8x4xi32>
    %28 = arith.cmpi eq, %11, %27 : vector<1x8x8x4xi32>
    %29 = arith.select %28, %0, %12 : vector<1x8x8x4xi1>, vector<1x8x8x4xf32>
    %30 = tpu.concatenate %26, %29 in 3 : vector<1x8x8x4xf32>, vector<1x8x8x4xf32> -> vector<1x8x8x8xf32>
    %31 = arith.truncf %30 : vector<1x8x8x8xf32> to vector<1x8x8x8xbf16>
    %c0_14 = arith.constant 0 : index
    %c0_15 = arith.constant 0 : index
    %c1 = arith.constant 1 : index
    %c0_16 = arith.constant 0 : index
    %c0_17 = arith.constant 0 : index
    %32 = vector.load %arg3[%c0_14, %c0_15, %c1, %c0_16, %c0_17] : memref<1x8x2x8x8xbf16, #tpu.memory_space<vmem>>, vector<1x8x1x8x8xbf16>
    %33 = vector.shape_cast %32 : vector<1x8x1x8x8xbf16> to vector<1x8x8x8xbf16>
    %34 = vector.shape_cast %31 : vector<1x8x8x8xbf16> to vector<1x8x1x8x8xbf16>
    tpu.vector_store %arg3[%c0_14, %c0_15, %c1, %c0_16, %c0_17], %34 {strides = array<i32>} : memref<1x8x2x8x8xbf16, #tpu.memory_space<vmem>>, vector<1x8x1x8x8xbf16>,
    return
  }
  func.func @transform_0(%arg0: i32) -> (i32, i32, i32, i32) {
    %c0_i32 = arith.constant 0 : i32
    %c0_i32_0 = arith.constant 0 : i32
    %c0_i32_1 = arith.constant 0 : i32
    %c0_i32_2 = arith.constant 0 : i32
    return %arg0, %c0_i32, %c0_i32_0, %c0_i32_1 : i32, i32, i32, i32
  }
  func.func @transform_1(%arg0: i32) -> (i32, i32, i32, i32) {
    %c0_i32 = arith.constant 0 : i32
    %c0_i32_0 = arith.constant 0 : i32
    %c0_i32_1 = arith.constant 0 : i32
    %c0_i32_2 = arith.constant 0 : i32
    return %arg0, %c0_i32, %c0_i32_0, %c0_i32_1 : i32, i32, i32, i32
  }
  func.func @transform_2(%arg0: i32) -> (i32, i32, i32, i32, i32) {
    %c0_i32 = arith.constant 0 : i32
    %c0_i32_0 = arith.constant 0 : i32
    %c0_i32_1 = arith.constant 0 : i32
    %c0_i32_2 = arith.constant 0 : i32
    %c0_i32_3 = arith.constant 0 : i32
    return %arg0, %c0_i32, %c0_i32_0, %c0_i32_1, %c0_i32_2 : i32, i32, i32, i32, i32
  }
}

</mosaic_0001>

<llo_original>
// kernel: tpu_custom_call.1
$region0: #{tpu_custom_call.1}
  #allocation0 [shape = 'u32[]', space=smem, size = 0x4, offset = 0x4, fixed_abs, tag = 'smem constant byte address 0x4 - core index']
  #allocation1 [shape = 'u32[72,128]{1,0:T(1,128)}', space=vmem, size = 0x9000, scoped, tag = 'internal scratch']
  %s0 = inlined_call_operand.vmem [shape: f32[2,8,8,4], index: 0, kind: input, shape index: {}]
  %s1 = inlined_call_operand.vmem [shape: s32[2,8,8,4], index: 1, kind: input, shape index: {}]
  %s2 = inlined_call_operand.hbm [shape: bf16[2,8,2,8,8], index: 2, kind: output, shape index: {}]
  %s3 = sld [smem:[#allocation0]]
  $region41: #{tpu_custom_call.1} parent=0
    _
  %s5 = ssub.s32 1, %s3
  %s6 = scalar_select 0, %s5, %s3
  $region1: #{tpu_custom_call.1} parent=0
    #allocation2 [shape = 'u8[65536]{0}', space=vmem, size = 0x10000, scoped, tag = 'output window, operand 0']
    #allocation3 [shape = 's32[2]{0}', space=sflag, size = 0x8, scoped, tag = 'scoped memory for tpu_custom_call.1']
    %7 = vsyncpa [#allocation3], 0
    %s8 = scalar_lea.sflag [#allocation3], 1
    %9 = vsyncpa %s8, 0
    loop: start=0, step=1, limit=4
    $region2: #{tpu_custom_call.1} parent=1 // loop_pre_header
      _
    $region3: #{tpu_custom_call.1} parent=1 // loop_header
      %s11 = sphi 0, %s15
      %p12 = scmp.ge.s32.totalorder %s11, 4
      %s21 = sphi 0, %s23
      %s24 = sphi 0, %s21
      %s25 = sphi 0, %s24
      %s41 = sphi 0, %s25
      %s47 = sphi 0, %s49
      %s50 = sphi 0, %s47
      %s51 = sphi 0, %s50
      %s67 = sphi 0, %s51
      %s73 = sphi 0, %s75
      %s76 = sphi 0, %s73
      %s77 = sphi 0, %s76
      %s93 = sphi 0, %s77
    $region4: #{tpu_custom_call.1} parent=1 // loop_header_branch
      %14 = sbr.rel (%p12) target = $region8
    $region5: #{tpu_custom_call.1} parent=1 // loop_body
      %s16 = ssub.s32 %s11, 1
      %s17 = ssub.s32 %s11, 2
      %s18 = sadd.s32 %s11, 1
      %s19 = ssub.s32 %s11, %s18
      %p20 = scmp.eq.s32.totalorder %s19, 0
      %s22 = sadd.s32 %s21, 1
      %s23 = scalar_select %p20, %s21, %s22
      %p26 = pneg %p20
      %p27 = scmp.eq.s32.totalorder %s11, 1
      %p28 = por %p26, %p27
      %p29 = scmp.ne.s32.totalorder %s21, %s24
      %p30 = scmp.eq.s32.totalorder %s11, 0
      %p31 = por %p29, %p30
      %p32 = scmp.ne.s32.totalorder %s21, %s24
      %p33 = scmp.eq.s32.totalorder %s16, 1
      %p34 = por %p32, %p33
      %p35 = scmp.ne.s32.totalorder %s24, %s25
      %p36 = scmp.eq.s32.totalorder %s16, 0
      %p37 = por %p35, %p36
      %p38 = scmp.ne.s32.totalorder %s24, %s25
      %p39 = scmp.eq.s32.totalorder %s17, 1
      %p40 = por %p38, %p39
      %p42 = scmp.ne.s32.totalorder %s25, %s41
      %p43 = scmp.eq.s32.totalorder %s17, 0
      %p44 = por %p42, %p43
      %s45 = ssub.s32 %s11, %s18
      %p46 = scmp.eq.s32.totalorder %s45, 0
      %s48 = sadd.s32 %s47, 1
      %s49 = scalar_select %p46, %s47, %s48
      %p52 = pneg %p46
      %p53 = scmp.eq.s32.totalorder %s11, 1
      %p54 = por %p52, %p53
      %p55 = scmp.ne.s32.totalorder %s47, %s50
      %p56 = scmp.eq.s32.totalorder %s11, 0
      %p57 = por %p55, %p56
      %p58 = scmp.ne.s32.totalorder %s47, %s50
      %p59 = scmp.eq.s32.totalorder %s16, 1
      %p60 = por %p58, %p59
      %p61 = scmp.ne.s32.totalorder %s50, %s51
      %p62 = scmp.eq.s32.totalorder %s16, 0
      %p63 = por %p61, %p62
      %p64 = scmp.ne.s32.totalorder %s50, %s51
      %p65 = scmp.eq.s32.totalorder %s17, 1
      %p66 = por %p64, %p65
      %p68 = scmp.ne.s32.totalorder %s51, %s67
      %p69 = scmp.eq.s32.totalorder %s17, 0
      %p70 = por %p68, %p69
      %s71 = ssub.s32 %s11, %s18
      %p72 = scmp.eq.s32.totalorder %s71, 0
      %s74 = sadd.s32 %s73, 1
      %s75 = scalar_select %p72, %s73, %s74
      %p78 = pneg %p72
      %p79 = scmp.eq.s32.totalorder %s11, 1
      %p80 = por %p78, %p79
      %p81 = scmp.ne.s32.totalorder %s73, %s76
      %p82 = scmp.eq.s32.totalorder %s11, 0
      %p83 = por %p81, %p82
      %p84 = scmp.ne.s32.totalorder %s73, %s76
      %p85 = scmp.eq.s32.totalorder %s16, 1
      %p86 = por %p84, %p85
      %p87 = scmp.ne.s32.totalorder %s76, %s77
      %p88 = scmp.eq.s32.totalorder %s16, 0
      %p89 = por %p87, %p88
      %p90 = scmp.ne.s32.totalorder %s76, %s77
      %p91 = scmp.eq.s32.totalorder %s17, 1
      %p92 = por %p90, %p91
      %p94 = scmp.ne.s32.totalorder %s77, %s93
      %p95 = scmp.eq.s32.totalorder %s17, 0
      %p96 = por %p94, %p95
      %p97 = scmp.le.s32.totalorder 1, %s11
      %p98 = scmp.lt.s32.totalorder %s11, 3
      %p99 = pnand %p97, %p98
      %p100 = pneg %p99
      // Predicated region
      $region9: #{tpu_custom_call.1} parent=5 // pred_check
        _
      $region10: #{tpu_custom_call.1} parent=5 // pred_check_branch
        %102 = sbr.rel (%p99) target = $region12
      $region11: #{tpu_custom_call.1} parent=5 // pred_region
        %s103 = ssub.s32 %s11, 1
      $region12: #{tpu_custom_call.1} parent=5 // pred_fallthru
        _
      %p104 = scmp.lt.s32.totalorder %s11, 2
      // Predicated region
      $region13: #{tpu_custom_call.1} parent=5 // pred_check
        %p105 = pneg %p104
      $region14: #{tpu_custom_call.1} parent=5 // pred_check_branch
        %107 = sbr.rel (%p105) target = $region16
      $region15: #{tpu_custom_call.1} parent=5 // pred_region
        // Predicated region
        $region17: #{tpu_custom_call.1} parent=15 // pred_check
          %p108 = pneg %p31
        $region18: #{tpu_custom_call.1} parent=15 // pred_check_branch
          %110 = sbr.rel (%p108) target = $region20
        $region19: #{tpu_custom_call.1} parent=15 // pred_region
          %p111 = scmp.lt.s32.totalorder %s11, 1
          %s112 = scalar_select %p111, %s11, 1
          %s113 = smul.addr %s112, 8
          %s114 = smul.addr %s113, 8
          %s115 = scalar_lea.vmem %s0, %s114
        $region20: #{tpu_custom_call.1} parent=15 // pred_fallthru
          _
        // Predicated region
        $region21: #{tpu_custom_call.1} parent=15 // pred_check
          %p116 = pneg %p57
        $region22: #{tpu_custom_call.1} parent=15 // pred_check_branch
          %118 = sbr.rel (%p116) target = $region24
        $region23: #{tpu_custom_call.1} parent=15 // pred_region
          %p119 = scmp.lt.s32.totalorder %s11, 1
          %s120 = scalar_select %p119, %s11, 1
          %s121 = smul.addr %s120, 8
          %s122 = smul.addr %s121, 8
          %s123 = scalar_lea.vmem %s1, %s122
        $region24: #{tpu_custom_call.1} parent=15 // pred_fallthru
          _
      $region16: #{tpu_custom_call.1} parent=5 // pred_fallthru
        _
      %p124 = scmp.le.s32.totalorder 1, %s11
      %p125 = scmp.lt.s32.totalorder %s11, 3
      %p126 = pnand %p124, %p125
      %p127 = pneg %p126
      // Predicated region
      $region25: #{tpu_custom_call.1} parent=5 // pred_check
        _
      $region26: #{tpu_custom_call.1} parent=5 // pred_check_branch
        %129 = sbr.rel (%p126) target = $region28
      $region27: #{tpu_custom_call.1} parent=5 // pred_region
        %s130 = ssub.s32 %s11, 1
        %p131 = scmp.lt.s32.totalorder %s16, 1
        %s132 = scalar_select %p131, %s16, 1
        %s133 = smul.addr %s132, 8
        %s134 = smul.addr %s133, 8
        %s135 = scalar_lea.vmem %s0, %s134
        %p136 = pneg %p37
        %p137 = pneg %p34
        %p138 = scmp.lt.s32.totalorder %s16, 1
        %s139 = scalar_select %p138, %s16, 1
        %s140 = smul.addr %s139, 8
        %s141 = smul.addr %s140, 8
        %s142 = scalar_lea.vmem %s1, %s141
        %p143 = pneg %p63
        %p144 = pneg %p60
        %p145 = pneg %p89
        %p146 = pneg %p86
        %s147 = sand.u32 %s76, 1
        %s148 = scalar_lea.sflag [#allocation3], %s147
        %s149 = sand.u32 %s76, 1
        %s150 = smul.addr %s149, 64
        %s151 = scalar_lea.vmem [#allocation2], %s150
        %p152 = scmp.lt.s32.totalorder %s16, 1
        %s153 = scalar_select %p152, %s16, 1
        %s154 = smul.addr %s153, 8
        %s155 = smul.addr %s154, 8
        %s156 = scalar_lea.vmem %s0, %s155
        %p157 = scmp.lt.s32.totalorder %s16, 1
        %s158 = scalar_select %p157, %s16, 1
        %s159 = smul.addr %s158, 8
        %s160 = smul.addr %s159, 8
        %s161 = scalar_lea.vmem %s1, %s160
        %v162 = vld [vmem:[%s156] sm:$0xff]
        %v163 = vld [vmem:[%s156 + $0x8] sm:$0xff]
        %v164 = vld [vmem:[%s156 + $0x10] sm:$0xff]
        %v165 = vld [vmem:[%s156 + $0x18] sm:$0xff]
        %v166 = vld [vmem:[%s156 + $0x20] sm:$0xff]
        %v167 = vld [vmem:[%s156 + $0x28] sm:$0xff]
        %v168 = vld [vmem:[%s156 + $0x30] sm:$0xff]
        %v169 = vld [vmem:[%s156 + $0x38] sm:$0xff]
        %v170 = vld [vmem:[%s161] sm:$0xff]
        %v171 = vld [vmem:[%s161 + $0x8] sm:$0xff]
        %v172 = vld [vmem:[%s161 + $0x10] sm:$0xff]
        %v173 = vld [vmem:[%s161 + $0x18] sm:$0xff]
        %v174 = vld [vmem:[%s161 + $0x20] sm:$0xff]
        %v175 = vld [vmem:[%s161 + $0x28] sm:$0xff]
        %v176 = vld [vmem:[%s161 + $0x30] sm:$0xff]
        %v177 = vld [vmem:[%s161 + $0x38] sm:$0xff]
        %v178 = vlaneseq
        %v179 = vshrl.u32 %v178, 7
        %v180 = vmul.u32 %v179, 2
        %v181 = vadd.s32 %v180, 32
        %v182 = vadd.s32 %v180, 64
        %v183 = vadd.s32 %v180, 96
        %v184 = vadd.s32 %v180, 128
        %v185 = vadd.s32 %v180, 160
        %v186 = vadd.s32 %v180, 192
        %v187 = vadd.s32 %v180, 224
        %v188 = vsub.s32 %v170, %v180
        %v189 = vsub.s32 %v171, %v181
        %v190 = vsub.s32 %v172, %v182
        %v191 = vsub.s32 %v173, %v183
        %v192 = vsub.s32 %v174, %v184
        %v193 = vsub.s32 %v175, %v185
        %v194 = vsub.s32 %v176, %v186
        %v195 = vsub.s32 %v177, %v187
        %vm196 = vcmp.eq.s32.totalorder %v188, 0
        %vm197 = vcmp.eq.s32.totalorder %v189, 0
        %vm198 = vcmp.eq.s32.totalorder %v190, 0
        %vm199 = vcmp.eq.s32.totalorder %v191, 0
        %vm200 = vcmp.eq.s32.totalorder %v192, 0
        %vm201 = vcmp.eq.s32.totalorder %v193, 0
        %vm202 = vcmp.eq.s32.totalorder %v194, 0
        %vm203 = vcmp.eq.s32.totalorder %v195, 0
        %v204 = vsel %vm196, %v162, 0.0
        %v205 = vsel %vm197, %v163, 0.0
        %v206 = vsel %vm198, %v164, 0.0
        %v207 = vsel %vm199, %v165, 0.0
        %v208 = vsel %vm200, %v166, 0.0
        %v209 = vsel %vm201, %v167, 0.0
        %v210 = vsel %vm202, %v168, 0.0
        %v211 = vsel %vm203, %v169, 0.0
        %vm212 = vcmp.eq.s32.totalorder %v188, 1
        %vm213 = vcmp.eq.s32.totalorder %v189, 1
        %vm214 = vcmp.eq.s32.totalorder %v190, 1
        %vm215 = vcmp.eq.s32.totalorder %v191, 1
        %vm216 = vcmp.eq.s32.totalorder %v192, 1
        %vm217 = vcmp.eq.s32.totalorder %v193, 1
        %vm218 = vcmp.eq.s32.totalorder %v194, 1
        %vm219 = vcmp.eq.s32.totalorder %v195, 1
        %v220 = vsel %vm212, %v162, 0.0
        %v221 = vsel %vm213, %v163, 0.0
        %v222 = vsel %vm214, %v164, 0.0
        %v223 = vsel %vm215, %v165, 0.0
        %v224 = vsel %vm216, %v166, 0.0
        %v225 = vsel %vm217, %v167, 0.0
        %v226 = vsel %vm218, %v168, 0.0
        %v227 = vsel %vm219, %v169, 0.0
        %236 = vrot.lane.b32.xlu0 %v220, 4
        %v237 = vpop.permute.xlu0 %236
        %238 = vrot.lane.b32.xlu0 %v221, 4
        %v239 = vpop.permute.xlu0 %238
        %240 = vrot.lane.b32.xlu0 %v222, 4
        %v241 = vpop.permute.xlu0 %240
        %242 = vrot.lane.b32.xlu0 %v223, 4
        %v243 = vpop.permute.xlu0 %242
        %244 = vrot.lane.b32.xlu0 %v224, 4
        %v245 = vpop.permute.xlu0 %244
        %246 = vrot.lane.b32.xlu0 %v225, 4
        %v247 = vpop.permute.xlu0 %246
        %248 = vrot.lane.b32.xlu0 %v226, 4
        %v249 = vpop.permute.xlu0 %248
        %250 = vrot.lane.b32.xlu0 %v227, 4
        %v251 = vpop.permute.xlu0 %250
        %vm260 = vcmask 31744
        %v261 = vsel %vm260, %v204, %v237
        %v262 = vsel %vm260, %v205, %v239
        %v263 = vsel %vm260, %v206, %v241
        %v264 = vsel %vm260, %v207, %v243
        %v265 = vsel %vm260, %v208, %v245
        %v266 = vsel %vm260, %v209, %v247
        %v267 = vsel %vm260, %v210, %v249
        %v268 = vsel %vm260, %v211, %v251
        %v269 = vpack.c.bf16 %v261, %v261
        %v270 = vpack.c.bf16 %v262, %v262
        %v271 = vpack.c.bf16 %v263, %v263
        %v272 = vpack.c.bf16 %v264, %v264
        %v273 = vpack.c.bf16 %v265, %v265
        %v274 = vpack.c.bf16 %v266, %v266
        %v275 = vpack.c.bf16 %v267, %v267
        %v276 = vpack.c.bf16 %v268, %v268
        %vm277 = vcmask 60416
        %278 = vst.msk [vmem:[%s151] sm:$0xf] %vm277, %v269
        %279 = vst.msk [vmem:[%s151 + $0x8] sm:$0xf] %vm277, %v270
        %280 = vst.msk [vmem:[%s151 + $0x10] sm:$0xf] %vm277, %v271
        %281 = vst.msk [vmem:[%s151 + $0x18] sm:$0xf] %vm277, %v272
        %282 = vst.msk [vmem:[%s151 + $0x20] sm:$0xf] %vm277, %v273
        %283 = vst.msk [vmem:[%s151 + $0x28] sm:$0xf] %vm277, %v274
        %284 = vst.msk [vmem:[%s151 + $0x30] sm:$0xf] %vm277, %v275
        %285 = vst.msk [vmem:[%s151 + $0x38] sm:$0xf] %vm277, %v276
        %vm286 = vcmp.eq.s32.totalorder %v188, 16
        %vm287 = vcmp.eq.s32.totalorder %v189, 16
        %vm288 = vcmp.eq.s32.totalorder %v190, 16
        %vm289 = vcmp.eq.s32.totalorder %v191, 16
        %vm290 = vcmp.eq.s32.totalorder %v192, 16
        %vm291 = vcmp.eq.s32.totalorder %v193, 16
        %vm292 = vcmp.eq.s32.totalorder %v194, 16
        %vm293 = vcmp.eq.s32.totalorder %v195, 16
        %v294 = vsel %vm286, %v162, 0.0
        %v295 = vsel %vm287, %v163, 0.0
        %v296 = vsel %vm288, %v164, 0.0
        %v297 = vsel %vm289, %v165, 0.0
        %v298 = vsel %vm290, %v166, 0.0
        %v299 = vsel %vm291, %v167, 0.0
        %v300 = vsel %vm292, %v168, 0.0
        %v301 = vsel %vm293, %v169, 0.0
        %vm302 = vcmp.eq.s32.totalorder %v188, 17
        %vm303 = vcmp.eq.s32.totalorder %v189, 17
        %vm304 = vcmp.eq.s32.totalorder %v190, 17
        %vm305 = vcmp.eq.s32.totalorder %v191, 17
        %vm306 = vcmp.eq.s32.totalorder %v192, 17
        %vm307 = vcmp.eq.s32.totalorder %v193, 17
        %vm308 = vcmp.eq.s32.totalorder %v194, 17
        %vm309 = vcmp.eq.s32.totalorder %v195, 17
        %v310 = vsel %vm302, %v162, 0.0
        %v311 = vsel %vm303, %v163, 0.0
        %v312 = vsel %vm304, %v164, 0.0
        %v313 = vsel %vm305, %v165, 0.0
        %v314 = vsel %vm306, %v166, 0.0
        %v315 = vsel %vm307, %v167, 0.0
        %v316 = vsel %vm308, %v168, 0.0
        %v317 = vsel %vm309, %v169, 0.0
        %326 = vrot.lane.b32.xlu0 %v310, 4
        %v327 = vpop.permute.xlu0 %326
        %328 = vrot.lane.b32.xlu0 %v311, 4
        %v329 = vpop.permute.xlu0 %328
        %330 = vrot.lane.b32.xlu0 %v312, 4
        %v331 = vpop.permute.xlu0 %330
        %332 = vrot.lane.b32.xlu0 %v313, 4
        %v333 = vpop.permute.xlu0 %332
        %334 = vrot.lane.b32.xlu0 %v314, 4
        %v335 = vpop.permute.xlu0 %334
        %336 = vrot.lane.b32.xlu0 %v315, 4
        %v337 = vpop.permute.xlu0 %336
        %338 = vrot.lane.b32.xlu0 %v316, 4
        %v339 = vpop.permute.xlu0 %338
        %340 = vrot.lane.b32.xlu0 %v317, 4
        %v341 = vpop.permute.xlu0 %340
        %v350 = vsel %vm260, %v294, %v327
        %v351 = vsel %vm260, %v295, %v329
        %v352 = vsel %vm260, %v296, %v331
        %v353 = vsel %vm260, %v297, %v333
        %v354 = vsel %vm260, %v298, %v335
        %v355 = vsel %vm260, %v299, %v337
        %v356 = vsel %vm260, %v300, %v339
        %v357 = vsel %vm260, %v301, %v341
        %v358 = vpack.c.bf16 %v350, %v350
        %v359 = vpack.c.bf16 %v351, %v351
        %v360 = vpack.c.bf16 %v352, %v352
        %v361 = vpack.c.bf16 %v353, %v353
        %v362 = vpack.c.bf16 %v354, %v354
        %v363 = vpack.c.bf16 %v355, %v355
        %v364 = vpack.c.bf16 %v356, %v356
        %v365 = vpack.c.bf16 %v357, %v357
        %s366 = scalar_lea.vmem %s151, 4 [#allocation2]
        %367 = vst.msk [vmem:[%s366] sm:$0xf] %vm277, %v358
        %368 = vst.msk [vmem:[%s366 + $0x8] sm:$0xf] %vm277, %v359
        %369 = vst.msk [vmem:[%s366 + $0x10] sm:$0xf] %vm277, %v360
        %370 = vst.msk [vmem:[%s366 + $0x18] sm:$0xf] %vm277, %v361
        %371 = vst.msk [vmem:[%s366 + $0x20] sm:$0xf] %vm277, %v362
        %372 = vst.msk [vmem:[%s366 + $0x28] sm:$0xf] %vm277, %v363
        %373 = vst.msk [vmem:[%s366 + $0x30] sm:$0xf] %vm277, %v364
        %374 = vst.msk [vmem:[%s366 + $0x38] sm:$0xf] %vm277, %v365
        %s375 = sand.u32 %s76, 1
        %s376 = scalar_lea.sflag [#allocation3], %s375
        %s377 = sand.u32 %s76, 1
        %s378 = smul.addr %s377, 64
        %s379 = scalar_lea.vmem [#allocation2], %s378
        // Predicated region
        $region29: #{tpu_custom_call.1} parent=27 // pred_check
          %p380 = pneg %p86
        $region30: #{tpu_custom_call.1} parent=27 // pred_check_branch
          %382 = sbr.rel (%p380) target = $region32
        $region31: #{tpu_custom_call.1} parent=27 // pred_region
          %384 = vsyncadd %s376, 0
          %s385 = smul.addr %s16, 16
          %s386 = smul.addr %s385, 4
          %s387 = scalar_lea.hbm %s2, %s386
          %s388 = sshll.u32 %s379, 4
          %s389 = int_to_ptr.vmem [resolvable:$true] %s388
          %s390 = sshll.u32 %s387, 4
          %s391 = int_to_ptr.hbm [resolvable:$true] %s390
          %396 = dma.vmem_to_hbm [thread:$0]  %s389, 1024, %s391, %s376, 64, 64, 4
        $region32: #{tpu_custom_call.1} parent=27 // pred_fallthru
          _
      $region28: #{tpu_custom_call.1} parent=5 // pred_fallthru
        _
      %p397 = scmp.le.s32.totalorder 2, %s11
      // Predicated region
      $region33: #{tpu_custom_call.1} parent=5 // pred_check
        %p398 = pneg %p397
      $region34: #{tpu_custom_call.1} parent=5 // pred_check_branch
        %400 = sbr.rel (%p398) target = $region36
      $region35: #{tpu_custom_call.1} parent=5 // pred_region
        %s401 = ssub.s32 %s11, 2
        // Predicated region
        $region37: #{tpu_custom_call.1} parent=35 // pred_check
          %p402 = pneg %p92
        $region38: #{tpu_custom_call.1} parent=35 // pred_check_branch
          %404 = sbr.rel (%p402) target = $region40
        $region39: #{tpu_custom_call.1} parent=35 // pred_region
          %s405 = sand.u32 %s77, 1
          %s406 = scalar_lea.sflag [#allocation3], %s405
          %s407 = sand.u32 %s77, 1
          %s408 = smul.addr %s407, 64
          %s409 = scalar_lea.vmem [#allocation2], %s408
          %411 = dma.done %s406, 1024
        $region40: #{tpu_custom_call.1} parent=35 // pred_fallthru
          _
      $region36: #{tpu_custom_call.1} parent=5 // pred_fallthru
        _
    $region6: #{tpu_custom_call.1} parent=1 // loop_footer
      %s15 = sadd.s32 1, %s11
    $region7: #{tpu_custom_call.1} parent=1 // loop_footer_branch
      %10 = sbr.rel target = $region3
    $region8: #{tpu_custom_call.1} parent=1 // loop_exit
      _
    %412 = vsyncpa [#allocation3], 1
    %s413 = scalar_lea.sflag [#allocation3], 1
    %414 = vsyncpa %s413, 1

</llo_original>
